<compile_context>
chip_gen: v5e
topology: v5e:2x2
jax: 0.10.0
libtpu: 0.0.40
codegen_flags: <defaults>
</compile_context>

<pallas_src>
import jax
import jax.numpy as jnp
from jax.experimental import pallas as pl
from jax.experimental.pallas import tpu as pltpu


def mlp_kernel(x_ref, w1_ref, b1_ref, wh_ref, bh_ref, out_ref):
    x = x_ref[...]                                               # [B, n_state]

    # hidden layer: Linear(n_state, 64) + ReLU
    h = jnp.dot(x, w1_ref[...], preferred_element_type=jnp.float32) + b1_ref[...]
    h = jnp.maximum(h, 0.0)                                      # [B, 64]

    # fused heads: one matmul produces [actor logits | critic] -> [B, A+1]
    heads = jnp.dot(h, wh_ref[...], preferred_element_type=jnp.float32) + bh_ref[...]

    # softmax over axis 0 (batch), per column (matches nn.Softmax(dim=0))
    m = jnp.max(heads, axis=0, keepdims=True)
    e = jnp.exp(heads - m)
    denom = jnp.sum(e, axis=0, keepdims=True)
    sm = e * pl.reciprocal(denom, approx=True)                   # EUP vrcp

    # actor columns take the softmax value, critic (last) column keeps raw value
    n_action = heads.shape[1] - 1
    col = jax.lax.broadcasted_iota(jnp.int32, heads.shape, dimension=1)
    out_ref[...] = jnp.where(col < n_action, sm, heads)          # [B, A+1]


def mlp_forward(x, fused_params):
    """x: [B, n_state] f32. fused_params from fuse_params(). Returns (actor, critic)."""
    B = x.shape[0]
    a1 = fused_params["wh"].shape[1]                             # n_action + 1
    out = pl.pallas_call(
        mlp_kernel,
        out_shape=jax.ShapeDtypeStruct((B, a1), jnp.float32),
        in_specs=[pl.BlockSpec(memory_space=pltpu.MemorySpace.VMEM)] * 5,
        out_specs=pl.BlockSpec(memory_space=pltpu.MemorySpace.VMEM),
    )(x, fused_params["w1"], fused_params["b1"],
      fused_params["wh"], fused_params["bh"])
    actor = out[:, : a1 - 1]                                     # [B, n_action]
    critic = out[:, a1 - 1:]                                     # [B, 1]
    return actor, critic


def init_params(key, n_state, n_action, hidden=64):
    """Deterministic init mimicking nn.Linear's uniform(-1/sqrt(fan_in), +)."""
    ks = jax.random.split(key, 6)

    def unif(k, shape, fan_in):
        bound = 1.0 / jnp.sqrt(jnp.float32(fan_in))
        return jax.random.uniform(k, shape, jnp.float32, -bound, bound)

    return {
        "w1": unif(ks[0], (n_state, hidden), n_state),
        "b1": unif(ks[1], (1, hidden), n_state),
        "wa": unif(ks[2], (hidden, n_action), hidden),
        "ba": unif(ks[3], (1, n_action), hidden),
        "wc": unif(ks[4], (hidden, 1), hidden),
        "bc": unif(ks[5], (1, 1), hidden),
    }


def fuse_params(p):
    """One-time head fusion: [wa | wc] and [ba | bc] (done outside the hot path)."""
    return {
        "w1": p["w1"],
        "b1": p["b1"],
        "wh": jnp.concatenate([p["wa"], p["wc"]], axis=1),   # [64, n_action + 1]
        "bh": jnp.concatenate([p["ba"], p["bc"]], axis=1),   # [1,  n_action + 1]
    }


def reference_forward(x, p):
    """Pure-JAX reference replicating the PyTorch forward exactly."""
    h = jnp.maximum(x @ p["w1"] + p["b1"], 0.0)
    logits = h @ p["wa"] + p["ba"]
    actor = jax.nn.softmax(logits, axis=0)          # nn.Softmax(dim=0)
    critic = h @ p["wc"] + p["bc"]
    return actor, critic


if __name__ == "__main__":
    # CartPole-like sizes: n_state=4, n_action=2, small batch of 8 states.
    B, n_state, n_action = 8, 4, 2
    key = jax.random.PRNGKey(0)
    k_x, k_p = jax.random.split(key)

    x = jax.random.normal(k_x, (B, n_state), dtype=jnp.float32)
    params = init_params(k_p, n_state, n_action)
    fused = fuse_params(params)

    actor, critic = mlp_forward(x, fused)
    actor, critic = jax.block_until_ready((actor, critic))

    # sanity check against pure-JAX reference
    ref_actor, ref_critic = reference_forward(x, params)
    assert actor.shape == (B, n_action) and critic.shape == (B, 1)
    # actor uses the approximate EUP reciprocal -> slightly looser tolerance
    assert jnp.allclose(actor, ref_actor, atol=2e-3, rtol=2e-3)
    assert jnp.allclose(critic, ref_critic, atol=1e-4, rtol=1e-4)
    # softmax over dim=0 -> each column of actor sums to 1
    assert jnp.allclose(jnp.sum(actor, axis=0), jnp.ones((n_action,)), atol=2e-3)

    print("KERNEL_OK")
</pallas_src>

<mosaic_0001>
module attributes {stable_mosaic.version = 11 : i64} {
  func.func @mlp_kernel(%arg0: memref<8x4xf32, #tpu.memory_space<vmem>>, %arg1: memref<4x64xf32, #tpu.memory_space<vmem>>, %arg2: memref<1x64xf32, #tpu.memory_space<vmem>>, %arg3: memref<64x3xf32, #tpu.memory_space<vmem>>, %arg4: memref<1x3xf32, #tpu.memory_space<vmem>>, %arg5: memref<8x3xf32, #tpu.memory_space<vmem>>) attributes {dimension_semantics = [], scalar_prefetch = 0 : i64, scratch_operands = 0 : i64, tpu.core_type = #tpu.core_type<tc>} {
    %c0 = arith.constant 0 : index
    %c0_0 = arith.constant 0 : index
    %0 = vector.load %arg0[%c0, %c0_0] : memref<8x4xf32, #tpu.memory_space<vmem>>, vector<8x4xf32>
    %c0_1 = arith.constant 0 : index
    %c0_2 = arith.constant 0 : index
    %1 = vector.load %arg1[%c0_1, %c0_2] : memref<4x64xf32, #tpu.memory_space<vmem>>, vector<4x64xf32>
    %cst = arith.constant dense<0.000000e+00> : vector<8x64xf32>
    %2 = tpu.matmul %0, %1, %cst {dimension_numbers = #tpu.dot_dimension_numbers<[1], [0], [0], [1], [0, 0, 1, 1], [], []>} : vector<8x4xf32>, vector<4x64xf32>, vector<8x64xf32> -> vector<8x64xf32>
    %c0_3 = arith.constant 0 : index
    %c0_4 = arith.constant 0 : index
    %3 = vector.load %arg2[%c0_3, %c0_4] : memref<1x64xf32, #tpu.memory_space<vmem>>, vector<1x64xf32>
    %4 = vector.broadcast %3 : vector<1x64xf32> to vector<8x64xf32>
    %5 = arith.addf %2, %4 : vector<8x64xf32>
    %cst_5 = arith.constant 0.000000e+00 : f32
    %6 = vector.broadcast %cst_5 : f32 to vector<8x64xf32>
    %7 = arith.maximumf %5, %6 : vector<8x64xf32>
    %c0_6 = arith.constant 0 : index
    %c0_7 = arith.constant 0 : index
    %8 = vector.load %arg3[%c0_6, %c0_7] : memref<64x3xf32, #tpu.memory_space<vmem>>, vector<64x3xf32>
    %cst_8 = arith.constant dense<0.000000e+00> : vector<8x3xf32>
    %9 = tpu.matmul %7, %8, %cst_8 {dimension_numbers = #tpu.dot_dimension_numbers<[1], [0], [0], [1], [0, 0, 1, 1], [], []>} : vector<8x64xf32>, vector<64x3xf32>, vector<8x3xf32> -> vector<8x3xf32>
    %c0_9 = arith.constant 0 : index
    %c0_10 = arith.constant 0 : index
    %10 = vector.load %arg4[%c0_9, %c0_10] : memref<1x3xf32, #tpu.memory_space<vmem>>, vector<1x3xf32>
    %11 = vector.broadcast %10 : vector<1x3xf32> to vector<8x3xf32>
    %12 = arith.addf %9, %11 : vector<8x3xf32>
    %cst_11 = arith.constant dense<0xFF800000> : vector<3xf32>
    %13 = vector.multi_reduction <maximumf>, %12, %cst_11 [0] : vector<8x3xf32> to vector<3xf32>
    %14 = vector.shape_cast %13 : vector<3xf32> to vector<1x3xf32>
    %15 = vector.broadcast %14 : vector<1x3xf32> to vector<8x3xf32>
    %16 = arith.subf %12, %15 : vector<8x3xf32>
    %17 = math.exp %16 : vector<8x3xf32>
    %cst_12 = arith.constant dense<0.000000e+00> : vector<3xf32>
    %18 = vector.multi_reduction <add>, %17, %cst_12 [0] : vector<8x3xf32> to vector<3xf32>
    %19 = vector.shape_cast %18 : vector<3xf32> to vector<1x3xf32>
    %20 = tpu.reciprocal %19 {approx = true} : vector<1x3xf32> -> vector<1x3xf32>
    %21 = vector.broadcast %20 : vector<1x3xf32> to vector<8x3xf32>
    %22 = arith.mulf %17, %21 : vector<8x3xf32>
    %23 = tpu.iota {dimensions = array<i32: 1>} : vector<8x3xi32>
    %c2_i32 = arith.constant 2 : i32
    %24 = vector.broadcast %c2_i32 : i32 to vector<8x3xi32>
    %25 = arith.cmpi slt, %23, %24 : vector<8x3xi32>
    %26 = arith.select %25, %22, %12 : vector<8x3xi1>, vector<8x3xf32>
    %c0_13 = arith.constant 0 : index
    %c0_14 = arith.constant 0 : index
    %27 = vector.load %arg5[%c0_13, %c0_14] : memref<8x3xf32, #tpu.memory_space<vmem>>, vector<8x3xf32>
    tpu.vector_store %arg5[%c0_13, %c0_14], %26 {strides = array<i32>} : memref<8x3xf32, #tpu.memory_space<vmem>>, vector<8x3xf32>,
    return
  }
}

</mosaic_0001>

<llo_original>
// kernel: tpu_custom_call.1
$region0: #{tpu_custom_call.1}
  #allocation0 [shape = 'u32[]', space=smem, size = 0x4, offset = 0x4, fixed_abs, tag = 'smem constant byte address 0x4 - core index']
  #allocation1 [shape = 'u32[72,128]{1,0:T(1,128)}', space=vmem, size = 0x9000, scoped, tag = 'internal scratch']
  %s0 = inlined_call_operand.vmem [shape: f32[8,4], index: 0, kind: input, shape index: {}]
  %s1 = inlined_call_operand.vmem [shape: f32[4,64], index: 1, kind: input, shape index: {}]
  %s2 = inlined_call_operand.vmem [shape: f32[1,64], index: 2, kind: input, shape index: {}]
  %s3 = inlined_call_operand.vmem [shape: f32[64,3], index: 3, kind: input, shape index: {}]
  %s4 = inlined_call_operand.vmem [shape: f32[1,3], index: 4, kind: input, shape index: {}]
  %s5 = inlined_call_operand.vmem [shape: f32[8,3], index: 5, kind: output, shape index: {}]
  %s6 = sld [smem:[#allocation0]]
  $region30: #{tpu_custom_call.1} parent=0
    _
  %s8 = ssub.s32 1, %s6
  %s9 = scalar_select 0, %s8, %s6
  // Predicated region
  $region2: #{tpu_custom_call.1} parent=0 // pred_check
    _
  $region3: #{tpu_custom_call.1} parent=0 // pred_check_branch
    %11 = sbr.rel (0) target = $region5
  $region4: #{tpu_custom_call.1} parent=0 // pred_region
    _
  $region5: #{tpu_custom_call.1} parent=0 // pred_fallthru
    _
  // Predicated region
  $region6: #{tpu_custom_call.1} parent=0 // pred_check
    _
  $region7: #{tpu_custom_call.1} parent=0 // pred_check_branch
    %13 = sbr.rel (0) target = $region9
  $region8: #{tpu_custom_call.1} parent=0 // pred_region
    _
  $region9: #{tpu_custom_call.1} parent=0 // pred_fallthru
    _
  // Predicated region
  $region10: #{tpu_custom_call.1} parent=0 // pred_check
    _
  $region11: #{tpu_custom_call.1} parent=0 // pred_check_branch
    %15 = sbr.rel (0) target = $region13
  $region12: #{tpu_custom_call.1} parent=0 // pred_region
    _
  $region13: #{tpu_custom_call.1} parent=0 // pred_fallthru
    _
  // Predicated region
  $region14: #{tpu_custom_call.1} parent=0 // pred_check
    _
  $region15: #{tpu_custom_call.1} parent=0 // pred_check_branch
    %17 = sbr.rel (0) target = $region17
  $region16: #{tpu_custom_call.1} parent=0 // pred_region
    _
  $region17: #{tpu_custom_call.1} parent=0 // pred_fallthru
    _
  // Predicated region
  $region18: #{tpu_custom_call.1} parent=0 // pred_check
    _
  $region19: #{tpu_custom_call.1} parent=0 // pred_check_branch
    %19 = sbr.rel (0) target = $region21
  $region20: #{tpu_custom_call.1} parent=0 // pred_region
    _
  $region21: #{tpu_custom_call.1} parent=0 // pred_fallthru
    _
  %v20 = vld [vmem:[%s0] sm:$0xff]
  %v21 = vld [vmem:[%s1] sm:$0xf]
  %v22 = vld [vmem:[%s2] sm:$0x1]
  %v24 = vperm.slane %v22, 0
  %vm26 = vcmask 31744
  %v28 = vsel %vm26, %v20, 0
  %vm30 = vcmask 1043456
  %v32 = vsel %vm30, %v21, 0
  %34 = vmatpush.msra.mxu0 0.0
  %35 = vmatpush.msra.mxu0 0.0
  %36 = vmatpush.msra.mxu0 0.0
  %37 = vmatpush.msra.mxu0 0.0
  %38 = vmatpush.msra.mxu0 0.0
  %39 = vmatpush.msra.mxu0 0.0
  %40 = vmatpush.msra.mxu0 0.0
  %41 = vmatpush.msra.mxu0 0.0
  %42 = vmatpush.msra.mxu0 0.0
  %43 = vmatpush.msra.mxu0 0.0
  %44 = vmatpush.msra.mxu0 0.0
  %45 = vmatpush.msra.mxu0 0.0
  %46 = vmatpush.msra.mxu0 0.0
  %47 = vmatpush.msra.mxu0 0.0
  %48 = vmatpush.msra.mxu0 0.0
  %49 = vmatpush.msra.mxu0 %v32
  %50 = vmatmul.f32.gmra.mxu0 %v28
  %v51 = vpop.f32.mrf.mxu0
  %v52 = vadd.f32 %v24, %v51
  %53 = vdwg.mxu0
  %v54 = vmax.f32 %v52, 0.0
  %v55 = vld [vmem:[%s3] sm:$0xff]
  %v56 = vld [vmem:[%s3 + $0x8] sm:$0xff]
  %v57 = vld [vmem:[%s3 + $0x10] sm:$0xff]
  %v58 = vld [vmem:[%s3 + $0x18] sm:$0xff]
  %v59 = vld [vmem:[%s3 + $0x20] sm:$0xff]
  %v60 = vld [vmem:[%s3 + $0x28] sm:$0xff]
  %v61 = vld [vmem:[%s3 + $0x30] sm:$0xff]
  %v62 = vld [vmem:[%s3 + $0x38] sm:$0xff]
  %v63 = vld [vmem:[%s4] sm:$0x1]
  %v65 = vperm.slane %v63, 0
  %vm67 = vcmask 523264
  %v69 = vsel %vm67, %v54, 0
  %71 = vmatpush.msra.mxu0 0.0
  %72 = vmatpush.msra.mxu0 0.0
  %73 = vmatpush.msra.mxu0 0.0
  %74 = vmatpush.msra.mxu0 0.0
  %75 = vmatpush.msra.mxu0 0.0
  %76 = vmatpush.msra.mxu0 0.0
  %77 = vmatpush.msra.mxu0 0.0
  %78 = vmatpush.msra.mxu0 0.0
  %79 = vmatpush.msra.mxu0 %v62
  %80 = vmatpush.msra.mxu0 %v61
  %81 = vmatpush.msra.mxu0 %v60
  %82 = vmatpush.msra.mxu0 %v59
  %83 = vmatpush.msra.mxu0 %v58
  %84 = vmatpush.msra.mxu0 %v57
  %85 = vmatpush.msra.mxu0 %v56
  %86 = vmatpush.msra.mxu0 %v55
  %87 = vmatmul.f32.gmra.mxu0 %v69
  %v88 = vpop.f32.mrf.mxu0
  %v89 = vadd.f32 %v65, %v88
  %90 = vdwg.mxu0
  %vm91 = vcmask 23552
  %v92 = vsel %vm91, %v89, -inf
  %v93 = vrot.slane %v92, 4
  %v94 = vmax.f32 %v92, %v93
  %v95 = vrot.slane %v94, 2
  %v96 = vmax.f32 %v94, %v95
  %v97 = vrot.slane %v96, 1
  %v98 = vmax.f32 %v96, %v97
  %v99 = vsub.f32 %v89, %v98
  %v100 = vmul.f32 %v99, 1.442695
  %v101 = vpow.pop %v100
  %v102 = vsel %vm91, %v101, 0.0
  %v103 = vrot.slane %v102, 4
  %v104 = vadd.f32 %v102, %v103
  %v105 = vrot.slane %v104, 2
  %v106 = vadd.f32 %v104, %v105
  %v107 = vrot.slane %v106, 1
  %v108 = vadd.f32 %v106, %v107
  %v109 = vrcp.pop %v108
  %v110 = vmul.f32 %v101, %v109
  %v111 = vlaneseq
  %v112 = vand.u32 %v111, 127
  %vm113 = vcmp.lt.s32.totalorder %v112, 2
  %v114 = vsel %vm113, %v110, %v89
  %115 = vst.msk [vmem:[%s5] sm:$0xff] %vm91, %v114
  // Predicated region
  $region22: #{tpu_custom_call.1} parent=0 // pred_check
    _
  $region23: #{tpu_custom_call.1} parent=0 // pred_check_branch
    %117 = sbr.rel (0) target = $region25
  $region24: #{tpu_custom_call.1} parent=0 // pred_region
    _
  $region25: #{tpu_custom_call.1} parent=0 // pred_fallthru
    _
  // Predicated region
  $region26: #{tpu_custom_call.1} parent=0 // pred_check
    _
  $region27: #{tpu_custom_call.1} parent=0 // pred_check_branch
    %119 = sbr.rel (0) target = $region29
  $region28: #{tpu_custom_call.1} parent=0 // pred_region
    _
  $region29: #{tpu_custom_call.1} parent=0 // pred_fallthru
    _

</llo_original>
